<compile_context>
chip_gen: v5e
topology: v5e:2x2
jax: 0.10.0
libtpu: 0.0.40
codegen_flags: <defaults>
</compile_context>

<pallas_src>
import functools

import jax
import jax.numpy as jnp
from jax.experimental import pallas as pl
from jax.experimental.pallas import tpu as pltpu

TEMPERATURE = 3.0
ALPHA = 0.7


def _kd_kernel(s_ref,      # VMEM (TB, C) f32   -- student logits tile
               x_ref,      # VMEM (TB, H) f32   -- teacher input tile
               lbl_ref,    # VMEM (TB, 1) int32 -- labels (lane-dense column)
               w_ref,      # VMEM (H, C)  bf16  -- teacher weight (resident)
               b_ref,      # VMEM (1, C)  f32   -- teacher bias (resident)
               out_ref,    # VMEM (1, 8, 128) f32 -- per-tile partial loss (broadcast scalar)
               *, temperature, alpha, batch):
    inv_t = jnp.float32(1.0 / temperature)
    tb, c = s_ref.shape

    # ---- frozen teacher forward: logits = x @ W + b (bf16 MXU operands, f32 accumulate) ----
    t_logits = jnp.dot(x_ref[...].astype(jnp.bfloat16), w_ref[...],
                       preferred_element_type=jnp.float32) + b_ref[...]

    # ---- teacher tempered-softmax statistics (f32 elementwise) ----
    # TODO(synk): for vocab-scale C, tile the class dim with an online LSE instead.
    t_scaled = t_logits * inv_t
    t_max = jnp.max(t_scaled, axis=1, keepdims=True)
    t_shift = t_scaled - t_max
    t_exp = jnp.exp(t_shift)
    t_sum = jnp.sum(t_exp, axis=1, keepdims=True)                       # (TB,1)

    # ---- student: one row-max shared by tempered and raw log-softmax ----
    s = s_ref[...].astype(jnp.float32)
    s_max = jnp.max(s, axis=1, keepdims=True)
    s_shift = s - s_max
    st_shift = s_shift * inv_t
    st_lse = jnp.log(jnp.sum(jnp.exp(st_shift), axis=1, keepdims=True))  # (TB,1)
    s_lse = jnp.log(jnp.sum(jnp.exp(s_shift), axis=1, keepdims=True))    # (TB,1), shifted lse

    # ---- KL per row (simplified; uses sum_c soft_targets == 1) ----
    #   kl_r = sum_c(t_exp * (t_shift - st_shift)) / t_sum - log(t_sum) + st_lse
    d = t_shift - st_shift
    wsum = jnp.sum(t_exp * d, axis=1, keepdims=True)                    # (TB,1)
    kl_row = wsum / t_sum - jnp.log(t_sum) + st_lse                     # (TB,1)

    # ---- hard CE per row: logsumexp(s_r) - s[r, label_r] (vectorized one-hot pick) ----
    lbl = lbl_ref[...]                                                  # (TB,1) int32
    one_hot = jax.lax.broadcasted_iota(jnp.int32, (tb, c), 1) == lbl
    picked = jnp.sum(jnp.where(one_hot, s, jnp.float32(0.0)), axis=1, keepdims=True)
    ce_row = (s_max + s_lse) - picked                                   # (TB,1)

    # ---- fold constant scalings, one combined cross-lane reduce ----
    kl_scale = jnp.float32(alpha * temperature * temperature / batch)
    ce_scale = jnp.float32((1.0 - alpha) / batch)
    partial = jnp.sum(kl_scale * kl_row + ce_scale * ce_row)            # scalar

    # Lane-dense partial-sum block (unmasked vst); final sum over tiles happens in JAX.
    out_ref[...] = jnp.zeros((1, 8, 128), jnp.float32) + partial


def _pick_tile_b(batch, hidden, classes, max_tile=256, vmem_budget=20 << 20):
    """Largest multiple of 8 dividing batch (capped) that fits the VMEM budget."""
    # TODO(synk): gate max_tile on pltpu.get_tpu_info() (128 on v5e, 256 on v6e/v7x).
    if batch % 8 != 0:
        return batch
    resident = hidden * classes * 2 + classes * 4        # bf16 W + f32 bias
    tb = min(batch, max_tile)
    tb -= tb % 8
    while tb >= 8:
        if batch % tb == 0:
            per_step = 2 * tb * (classes * 4 + hidden * 4 + 4)   # double-buffered tiled inputs
            if per_step + 2 * resident <= vmem_budget:
                return tb
        tb -= 8
    return batch


def _kd_pallas_call(student_logits, teacher_input, labels_2d, w_bf16, bias_2d, *,
                    tile_b, temperature, alpha, single_buffer_consts):
    B, C = student_logits.shape
    H = teacher_input.shape[1]
    n_tiles = B // tile_b

    const_kwargs = {}
    if single_buffer_consts:
        # Resident operands (constant index_map): one VMEM buffer instead of two.
        const_kwargs = dict(pipeline_mode=pl.Buffered(1))

    kernel = functools.partial(_kd_kernel, temperature=float(temperature),
                               alpha=float(alpha), batch=B)

    grid_spec = pltpu.PrefetchScalarGridSpec(
        num_scalar_prefetch=0,
        grid=(n_tiles,),
        in_specs=[
            pl.BlockSpec((tile_b, C), lambda i: (i, 0)),                # student logits tile
            pl.BlockSpec((tile_b, H), lambda i: (i, 0)),                # teacher input tile
            pl.BlockSpec((tile_b, 1), lambda i: (i, 0)),                # labels column
            pl.BlockSpec((H, C), lambda i: (0, 0), **const_kwargs),     # teacher W (resident, bf16)
            pl.BlockSpec((1, C), lambda i: (0, 0), **const_kwargs),     # teacher bias (resident)
        ],
        out_specs=pl.BlockSpec((1, 8, 128), lambda i: (i, 0, 0)),       # per-tile partial sums
    )

    return pl.pallas_call(
        kernel,
        out_shape=jax.ShapeDtypeStruct((n_tiles, 8, 128), jnp.float32),
        grid_spec=grid_spec,
        compiler_params=pltpu.CompilerParams(
            # independent per-tile partial sums -> megacore/v7x-friendly parallel axis
            dimension_semantics=("parallel",),
            # explicit; v5e default scoped VMEM is only 16 MiB
            vmem_limit_bytes=32 * 1024 * 1024,
        ),
    )(student_logits, teacher_input, labels_2d, w_bf16, bias_2d)


def knowledge_distillation_loss(student_logits, teacher_input, labels,
                                teacher_w, teacher_b,
                                temperature=TEMPERATURE, alpha=ALPHA, tile_b=None):
    """Pallas-fused KD loss (frozen linear teacher). Returns a scalar float32."""
    B, C = student_logits.shape
    H = teacher_input.shape[1]
    assert teacher_input.shape[0] == B and teacher_w.shape == (H, C)

    if tile_b is None:
        tile_b = _pick_tile_b(B, H, C)
    if B % tile_b != 0 or (tile_b != B and tile_b % 8 != 0):
        tile_b = B   # no padded rows: every batch row is covered exactly once

    labels_2d = labels.astype(jnp.int32).reshape(B, 1)
    bias_2d = teacher_b.reshape(1, C).astype(jnp.float32)
    w_bf16 = teacher_w.astype(jnp.bfloat16)   # full-rate MXU + half the resident VMEM footprint

    call = functools.partial(
        _kd_pallas_call, student_logits, teacher_input, labels_2d, w_bf16, bias_2d,
        tile_b=tile_b, temperature=temperature, alpha=alpha)
    try:
        partials = call(single_buffer_consts=True)
    except Exception:
        # TODO(synk): pl.Buffered(1) (single-buffered resident W/bias) rejected on this JAX
        # version; fall back to default double-buffering of the constant operands.
        partials = call(single_buffer_consts=False)

    return jnp.sum(partials[:, 0, 0])


if __name__ == "__main__":
    # Shapes consistent with the module's forward:
    #   student_logits: [B, C], teacher_input: [B, H], labels: [B]
    B, H, C = 32, 32, 16

    key = jax.random.PRNGKey(0)
    k1, k2, k3, k4, k5 = jax.random.split(key, 5)

    student_logits = jax.random.normal(k1, (B, C), dtype=jnp.float32)
    teacher_input = jax.random.normal(k2, (B, H), dtype=jnp.float32)
    labels = jax.random.randint(k3, (B,), 0, C, dtype=jnp.int32)

    # Deterministic frozen teacher (single Linear layer: H -> C)
    teacher_w = (jax.random.normal(k4, (H, C), dtype=jnp.float32)
                 / jnp.sqrt(jnp.float32(H)))
    teacher_b = jax.random.normal(k5, (C,), dtype=jnp.float32) * 0.01

    # Pure-JAX reference (true module semantics; teacher matmul in full f32).
    t_logits = jnp.dot(teacher_input, teacher_w,
                       precision=jax.lax.Precision.HIGHEST) + teacher_b
    soft_t = jax.nn.softmax(t_logits / TEMPERATURE, axis=1)
    log_soft_s = jax.nn.log_softmax(student_logits / TEMPERATURE, axis=1)
    distill = jnp.sum(soft_t * (jnp.log(soft_t) - log_soft_s)) / B * TEMPERATURE ** 2
    logp = jax.nn.log_softmax(student_logits, axis=1)
    hard = -jnp.mean(logp[jnp.arange(B), labels])
    ref = ALPHA * distill + (1.0 - ALPHA) * hard

    # Single grid step (auto tile = B) and multi-tile (grid=(4,)) paths.
    loss_full = knowledge_distillation_loss(student_logits, teacher_input, labels,
                                            teacher_w, teacher_b)
    jax.block_until_ready(loss_full)
    loss_tiled = knowledge_distillation_loss(student_logits, teacher_input, labels,
                                             teacher_w, teacher_b, tile_b=8)
    jax.block_until_ready(loss_tiled)

    # bf16 MXU operands for the teacher matmul vs. the f32 reference -> a few e-4 gap here.
    assert jnp.allclose(loss_full, ref, atol=2e-3, rtol=2e-3), (loss_full, ref)
    assert jnp.allclose(loss_tiled, ref, atol=2e-3, rtol=2e-3), (loss_tiled, ref)
    assert jnp.allclose(loss_full, loss_tiled, atol=1e-5, rtol=1e-5), (loss_full, loss_tiled)
    print("KERNEL_OK")
</pallas_src>

<mosaic_0001>
module attributes {stable_mosaic.version = 11 : i64} {
  func.func @_kd_kernel(%arg0: i32, %arg1: memref<32x16xf32, #tpu.memory_space<vmem>>, %arg2: memref<32x32xf32, #tpu.memory_space<vmem>>, %arg3: memref<32x1xi32, #tpu.memory_space<vmem>>, %arg4: memref<32x16xbf16, #tpu.memory_space<vmem>>, %arg5: memref<1x16xf32, #tpu.memory_space<vmem>>, %arg6: memref<1x8x128xf32, #tpu.memory_space<vmem>>) attributes {dimension_semantics = [#tpu.dimension_semantics<parallel>], iteration_bounds = array<i64: 1>, scalar_prefetch = 0 : i64, scratch_operands = 0 : i64, tpu.core_type = #tpu.core_type<tc>, window_params = [{transform_indices = @transform_0, window_bounds = array<i64: 32, 16>}, {transform_indices = @transform_1, window_bounds = array<i64: 32, 32>}, {transform_indices = @transform_2, window_bounds = array<i64: 32, 1>}, {pipeline_mode = #tpu.pipeline_mode<synchronous>, transform_indices = @transform_3, window_bounds = array<i64: 32, 16>}, {pipeline_mode = #tpu.pipeline_mode<synchronous>, transform_indices = @transform_4, window_bounds = array<i64: 1, 16>}, {transform_indices = @transform_5, window_bounds = array<i64: 1, 8, 128>}]} {
    %c0 = arith.constant 0 : index
    %c0_0 = arith.constant 0 : index
    %0 = vector.load %arg2[%c0, %c0_0] : memref<32x32xf32, #tpu.memory_space<vmem>>, vector<32x32xf32>
    %1 = arith.truncf %0 : vector<32x32xf32> to vector<32x32xbf16>
    %c0_1 = arith.constant 0 : index
    %c0_2 = arith.constant 0 : index
    %2 = vector.load %arg4[%c0_1, %c0_2] : memref<32x16xbf16, #tpu.memory_space<vmem>>, vector<32x16xbf16>
    %cst = arith.constant dense<0.000000e+00> : vector<32x16xf32>
    %3 = tpu.matmul %1, %2, %cst {dimension_numbers = #tpu.dot_dimension_numbers<[1], [0], [0], [1], [0, 0, 1, 1], [], []>} : vector<32x32xbf16>, vector<32x16xbf16>, vector<32x16xf32> -> vector<32x16xf32>
    %c0_3 = arith.constant 0 : index
    %c0_4 = arith.constant 0 : index
    %4 = vector.load %arg5[%c0_3, %c0_4] : memref<1x16xf32, #tpu.memory_space<vmem>>, vector<1x16xf32>
    %5 = vector.broadcast %4 : vector<1x16xf32> to vector<32x16xf32>
    %6 = arith.addf %3, %5 : vector<32x16xf32>
    %cst_5 = arith.constant 0.333333343 : f32
    %7 = vector.broadcast %cst_5 : f32 to vector<32x16xf32>
    %8 = arith.mulf %6, %7 : vector<32x16xf32>
    %cst_6 = arith.constant dense<0xFF800000> : vector<32xf32>
    %9 = vector.multi_reduction <maximumf>, %8, %cst_6 [1] : vector<32x16xf32> to vector<32xf32>
    %10 = vector.shape_cast %9 : vector<32xf32> to vector<32x1xf32>
    %11 = vector.broadcast %10 : vector<32x1xf32> to vector<32x16xf32>
    %12 = arith.subf %8, %11 : vector<32x16xf32>
    %13 = math.exp %12 : vector<32x16xf32>
    %cst_7 = arith.constant dense<0.000000e+00> : vector<32xf32>
    %14 = vector.multi_reduction <add>, %13, %cst_7 [1] : vector<32x16xf32> to vector<32xf32>
    %15 = vector.shape_cast %14 : vector<32xf32> to vector<32x1xf32>
    %c0_8 = arith.constant 0 : index
    %c0_9 = arith.constant 0 : index
    %16 = vector.load %arg1[%c0_8, %c0_9] : memref<32x16xf32, #tpu.memory_space<vmem>>, vector<32x16xf32>
    %cst_10 = arith.constant dense<0xFF800000> : vector<32xf32>
    %17 = vector.multi_reduction <maximumf>, %16, %cst_10 [1] : vector<32x16xf32> to vector<32xf32>
    %18 = vector.shape_cast %17 : vector<32xf32> to vector<32x1xf32>
    %19 = vector.broadcast %18 : vector<32x1xf32> to vector<32x16xf32>
    %20 = arith.subf %16, %19 : vector<32x16xf32>
    %cst_11 = arith.constant 0.333333343 : f32
    %21 = vector.broadcast %cst_11 : f32 to vector<32x16xf32>
    %22 = arith.mulf %20, %21 : vector<32x16xf32>
    %23 = math.exp %22 : vector<32x16xf32>
    %cst_12 = arith.constant dense<0.000000e+00> : vector<32xf32>
    %24 = vector.multi_reduction <add>, %23, %cst_12 [1] : vector<32x16xf32> to vector<32xf32>
    %25 = vector.shape_cast %24 : vector<32xf32> to vector<32x1xf32>
    %26 = math.log %25 : vector<32x1xf32>
    %27 = math.exp %20 : vector<32x16xf32>
    %cst_13 = arith.constant dense<0.000000e+00> : vector<32xf32>
    %28 = vector.multi_reduction <add>, %27, %cst_13 [1] : vector<32x16xf32> to vector<32xf32>
    %29 = vector.shape_cast %28 : vector<32xf32> to vector<32x1xf32>
    %30 = math.log %29 : vector<32x1xf32>
    %31 = arith.subf %12, %22 : vector<32x16xf32>
    %32 = arith.mulf %13, %31 : vector<32x16xf32>
    %cst_14 = arith.constant dense<0.000000e+00> : vector<32xf32>
    %33 = vector.multi_reduction <add>, %32, %cst_14 [1] : vector<32x16xf32> to vector<32xf32>
    %34 = vector.shape_cast %33 : vector<32xf32> to vector<32x1xf32>
    %35 = arith.divf %34, %15 : vector<32x1xf32>
    %36 = math.log %15 : vector<32x1xf32>
    %37 = arith.subf %35, %36 : vector<32x1xf32>
    %38 = arith.addf %37, %26 : vector<32x1xf32>
    %c0_15 = arith.constant 0 : index
    %c0_16 = arith.constant 0 : index
    %39 = vector.load %arg3[%c0_15, %c0_16] : memref<32x1xi32, #tpu.memory_space<vmem>>, vector<32x1xi32>
    %40 = tpu.iota {dimensions = array<i32: 1>} : vector<32x16xi32>
    %41 = vector.broadcast %39 : vector<32x1xi32> to vector<32x16xi32>
    %42 = arith.cmpi eq, %40, %41 : vector<32x16xi32>
    %cst_17 = arith.constant 0.000000e+00 : f32
    %43 = vector.broadcast %cst_17 : f32 to vector<32x16xf32>
    %44 = arith.select %42, %16, %43 : vector<32x16xi1>, vector<32x16xf32>
    %cst_18 = arith.constant dense<0.000000e+00> : vector<32xf32>
    %45 = vector.multi_reduction <add>, %44, %cst_18 [1] : vector<32x16xf32> to vector<32xf32>
    %46 = vector.shape_cast %45 : vector<32xf32> to vector<32x1xf32>
    %47 = arith.addf %18, %30 : vector<32x1xf32>
    %48 = arith.subf %47, %46 : vector<32x1xf32>
    %cst_19 = arith.constant 1.968750e-01 : f32
    %49 = vector.broadcast %cst_19 : f32 to vector<32x1xf32>
    %50 = arith.mulf %49, %38 : vector<32x1xf32>
    %cst_20 = arith.constant 9.375000e-03 : f32
    %51 = vector.broadcast %cst_20 : f32 to vector<32x1xf32>
    %52 = arith.mulf %51, %48 : vector<32x1xf32>
    %53 = arith.addf %50, %52 : vector<32x1xf32>
    %54 = vector.shape_cast %53 : vector<32x1xf32> to vector<1x32x1xf32>
    %cst_21 = arith.constant dense<0.000000e+00> : vector<1xf32>
    %55 = vector.multi_reduction <add>, %54, %cst_21 [1, 2] : vector<1x32x1xf32> to vector<1xf32>
    %56 = vector.shape_cast %55 : vector<1xf32> to vector<1x1x1xf32>
    %57 = vector.extract %56[0, 0, 0] : f32 from vector<1x1x1xf32>
    %cst_22 = arith.constant 0.000000e+00 : f32
    %58 = vector.broadcast %cst_22 : f32 to vector<1x8x128xf32>
    %59 = vector.broadcast %57 : f32 to vector<1x8x128xf32>
    %60 = arith.addf %58, %59 : vector<1x8x128xf32>
    %c0_23 = arith.constant 0 : index
    %c0_24 = arith.constant 0 : index
    %c0_25 = arith.constant 0 : index
    %61 = vector.load %arg6[%c0_23, %c0_24, %c0_25] : memref<1x8x128xf32, #tpu.memory_space<vmem>>, vector<1x8x128xf32>
    tpu.vector_store %arg6[%c0_23, %c0_24, %c0_25], %60 {strides = array<i32>} : memref<1x8x128xf32, #tpu.memory_space<vmem>>, vector<1x8x128xf32>,
    return
  }
  func.func @transform_0(%arg0: i32) -> (i32, i32) {
    %c0_i32 = arith.constant 0 : i32
    %c0_i32_0 = arith.constant 0 : i32
    return %arg0, %c0_i32 : i32, i32
  }
  func.func @transform_1(%arg0: i32) -> (i32, i32) {
    %c0_i32 = arith.constant 0 : i32
    %c0_i32_0 = arith.constant 0 : i32
    return %arg0, %c0_i32 : i32, i32
  }
  func.func @transform_2(%arg0: i32) -> (i32, i32) {
    %c0_i32 = arith.constant 0 : i32
    %c0_i32_0 = arith.constant 0 : i32
    return %arg0, %c0_i32 : i32, i32
  }
  func.func @transform_3(%arg0: i32) -> (i32, i32) {
    %c0_i32 = arith.constant 0 : i32
    %c0_i32_0 = arith.constant 0 : i32
    %c0_i32_1 = arith.constant 0 : i32
    return %c0_i32, %c0_i32_0 : i32, i32
  }
  func.func @transform_4(%arg0: i32) -> (i32, i32) {
    %c0_i32 = arith.constant 0 : i32
    %c0_i32_0 = arith.constant 0 : i32
    %c0_i32_1 = arith.constant 0 : i32
    return %c0_i32, %c0_i32_0 : i32, i32
  }
  func.func @transform_5(%arg0: i32) -> (i32, i32, i32) {
    %c0_i32 = arith.constant 0 : i32
    %c0_i32_0 = arith.constant 0 : i32
    %c0_i32_1 = arith.constant 0 : i32
    return %arg0, %c0_i32, %c0_i32_0 : i32, i32, i32
  }
}

module attributes {stable_mosaic.version = 11 : i64} {
  func.func @_kd_kernel(%arg0: i32, %arg1: memref<32x16xf32, #tpu.memory_space<vmem>>, %arg2: memref<32x32xf32, #tpu.memory_space<vmem>>, %arg3: memref<32x1xi32, #tpu.memory_space<vmem>>, %arg4: memref<32x16xbf16, #tpu.memory_space<vmem>>, %arg5: memref<1x16xf32, #tpu.memory_space<vmem>>, %arg6: memref<1x8x128xf32, #tpu.memory_space<vmem>>) attributes {dimension_semantics = [#tpu.dimension_semantics<parallel>], iteration_bounds = array<i64: 1>, scalar_prefetch = 0 : i64, scratch_operands = 0 : i64, tpu.core_type = #tpu.core_type<tc>, window_params = [{transform_indices = @transform_0, window_bounds = array<i64: 32, 16>}, {transform_indices = @transform_1, window_bounds = array<i64: 32, 32>}, {transform_indices = @transform_2, window_bounds = array<i64: 32, 1>}, {pipeline_mode = #tpu.pipeline_mode<synchronous>, transform_indices = @transform_3, window_bounds = array<i64: 32, 16>}, {pipeline_mode = #tpu.pipeline_mode<synchronous>, transform_indices = @transform_4, window_bounds = array<i64: 1, 16>}, {transform_indices = @transform_5, window_bounds = array<i64: 1, 8, 128>}]} {
    %c0 = arith.constant 0 : index
    %c0_0 = arith.constant 0 : index
    %0 = vector.load %arg2[%c0, %c0_0] : memref<32x32xf32, #tpu.memory_space<vmem>>, vector<32x32xf32>
    %1 = arith.truncf %0 : vector<32x32xf32> to vector<32x32xbf16>
    %c0_1 = arith.constant 0 : index
    %c0_2 = arith.constant 0 : index
    %2 = vector.load %arg4[%c0_1, %c0_2] : memref<32x16xbf16, #tpu.memory_space<vmem>>, vector<32x16xbf16>
    %cst = arith.constant dense<0.000000e+00> : vector<32x16xf32>
    %3 = tpu.matmul %1, %2, %cst {dimension_numbers = #tpu.dot_dimension_numbers<[1], [0], [0], [1], [0, 0, 1, 1], [], []>} : vector<32x32xbf16>, vector<32x16xbf16>, vector<32x16xf32> -> vector<32x16xf32>
    %c0_3 = arith.constant 0 : index
    %c0_4 = arith.constant 0 : index
    %4 = vector.load %arg5[%c0_3, %c0_4] : memref<1x16xf32, #tpu.memory_space<vmem>>, vector<1x16xf32>
    %5 = vector.broadcast %4 : vector<1x16xf32> to vector<32x16xf32>
    %6 = arith.addf %3, %5 : vector<32x16xf32>
    %cst_5 = arith.constant 0.333333343 : f32
    %7 = vector.broadcast %cst_5 : f32 to vector<32x16xf32>
    %8 = arith.mulf %6, %7 : vector<32x16xf32>
    %cst_6 = arith.constant dense<0xFF800000> : vector<32xf32>
    %9 = vector.multi_reduction <maximumf>, %8, %cst_6 [1] : vector<32x16xf32> to vector<32xf32>
    %10 = vector.shape_cast %9 : vector<32xf32> to vector<32x1xf32>
    %11 = vector.broadcast %10 : vector<32x1xf32> to vector<32x16xf32>
    %12 = arith.subf %8, %11 : vector<32x16xf32>
    %13 = math.exp %12 : vector<32x16xf32>
    %cst_7 = arith.constant dense<0.000000e+00> : vector<32xf32>
    %14 = vector.multi_reduction <add>, %13, %cst_7 [1] : vector<32x16xf32> to vector<32xf32>
    %15 = vector.shape_cast %14 : vector<32xf32> to vector<32x1xf32>
    %c0_8 = arith.constant 0 : index
    %c0_9 = arith.constant 0 : index
    %16 = vector.load %arg1[%c0_8, %c0_9] : memref<32x16xf32, #tpu.memory_space<vmem>>, vector<32x16xf32>
    %cst_10 = arith.constant dense<0xFF800000> : vector<32xf32>
    %17 = vector.multi_reduction <maximumf>, %16, %cst_10 [1] : vector<32x16xf32> to vector<32xf32>
    %18 = vector.shape_cast %17 : vector<32xf32> to vector<32x1xf32>
    %19 = vector.broadcast %18 : vector<32x1xf32> to vector<32x16xf32>
    %20 = arith.subf %16, %19 : vector<32x16xf32>
    %cst_11 = arith.constant 0.333333343 : f32
    %21 = vector.broadcast %cst_11 : f32 to vector<32x16xf32>
    %22 = arith.mulf %20, %21 : vector<32x16xf32>
    %23 = math.exp %22 : vector<32x16xf32>
    %cst_12 = arith.constant dense<0.000000e+00> : vector<32xf32>
    %24 = vector.multi_reduction <add>, %23, %cst_12 [1] : vector<32x16xf32> to vector<32xf32>
    %25 = vector.shape_cast %24 : vector<32xf32> to vector<32x1xf32>
    %26 = math.log %25 : vector<32x1xf32>
    %27 = math.exp %20 : vector<32x16xf32>
    %cst_13 = arith.constant dense<0.000000e+00> : vector<32xf32>
    %28 = vector.multi_reduction <add>, %27, %cst_13 [1] : vector<32x16xf32> to vector<32xf32>
    %29 = vector.shape_cast %28 : vector<32xf32> to vector<32x1xf32>
    %30 = math.log %29 : vector<32x1xf32>
    %31 = arith.subf %12, %22 : vector<32x16xf32>
    %32 = arith.mulf %13, %31 : vector<32x16xf32>
    %cst_14 = arith.constant dense<0.000000e+00> : vector<32xf32>
    %33 = vector.multi_reduction <add>, %32, %cst_14 [1] : vector<32x16xf32> to vector<32xf32>
    %34 = vector.shape_cast %33 : vector<32xf32> to vector<32x1xf32>
    %35 = arith.divf %34, %15 : vector<32x1xf32>
    %36 = math.log %15 : vector<32x1xf32>
    %37 = arith.subf %35, %36 : vector<32x1xf32>
    %38 = arith.addf %37, %26 : vector<32x1xf32>
    %c0_15 = arith.constant 0 : index
    %c0_16 = arith.constant 0 : index
    %39 = vector.load %arg3[%c0_15, %c0_16] : memref<32x1xi32, #tpu.memory_space<vmem>>, vector<32x1xi32>
    %40 = tpu.iota {dimensions = array<i32: 1>} : vector<32x16xi32>
    %41 = vector.broadcast %39 : vector<32x1xi32> to vector<32x16xi32>
    %42 = arith.cmpi eq, %40, %41 : vector<32x16xi32>
    %cst_17 = arith.constant 0.000000e+00 : f32
    %43 = vector.broadcast %cst_17 : f32 to vector<32x16xf32>
    %44 = arith.select %42, %16, %43 : vector<32x16xi1>, vector<32x16xf32>
    %cst_18 = arith.constant dense<0.000000e+00> : vector<32xf32>
    %45 = vector.multi_reduction <add>, %44, %cst_18 [1] : vector<32x16xf32> to vector<32xf32>
    %46 = vector.shape_cast %45 : vector<32xf32> to vector<32x1xf32>
    %47 = arith.addf %18, %30 : vector<32x1xf32>
    %48 = arith.subf %47, %46 : vector<32x1xf32>
    %cst_19 = arith.constant 1.968750e-01 : f32
    %49 = vector.broadcast %cst_19 : f32 to vector<32x1xf32>
    %50 = arith.mulf %49, %38 : vector<32x1xf32>
    %cst_20 = arith.constant 9.375000e-03 : f32
    %51 = vector.broadcast %cst_20 : f32 to vector<32x1xf32>
    %52 = arith.mulf %51, %48 : vector<32x1xf32>
    %53 = arith.addf %50, %52 : vector<32x1xf32>
    %54 = vector.shape_cast %53 : vector<32x1xf32> to vector<1x32x1xf32>
    %cst_21 = arith.constant dense<0.000000e+00> : vector<1xf32>
    %55 = vector.multi_reduction <add>, %54, %cst_21 [1, 2] : vector<1x32x1xf32> to vector<1xf32>
    %56 = vector.shape_cast %55 : vector<1xf32> to vector<1x1x1xf32>
    %57 = vector.extract %56[0, 0, 0] : f32 from vector<1x1x1xf32>
    %cst_22 = arith.constant 0.000000e+00 : f32
    %58 = vector.broadcast %cst_22 : f32 to vector<1x8x128xf32>
    %59 = vector.broadcast %57 : f32 to vector<1x8x128xf32>
    %60 = arith.addf %58, %59 : vector<1x8x128xf32>
    %c0_23 = arith.constant 0 : index
    %c0_24 = arith.constant 0 : index
    %c0_25 = arith.constant 0 : index
    %61 = vector.load %arg6[%c0_23, %c0_24, %c0_25] : memref<1x8x128xf32, #tpu.memory_space<vmem>>, vector<1x8x128xf32>
    tpu.vector_store %arg6[%c0_23, %c0_24, %c0_25], %60 {strides = array<i32>} : memref<1x8x128xf32, #tpu.memory_space<vmem>>, vector<1x8x128xf32>,
    return
  }
  func.func @transform_0(%arg0: i32) -> (i32, i32) {
    %c0_i32 = arith.constant 0 : i32
    %c0_i32_0 = arith.constant 0 : i32
    return %arg0, %c0_i32 : i32, i32
  }
  func.func @transform_1(%arg0: i32) -> (i32, i32) {
    %c0_i32 = arith.constant 0 : i32
    %c0_i32_0 = arith.constant 0 : i32
    return %arg0, %c0_i32 : i32, i32
  }
  func.func @transform_2(%arg0: i32) -> (i32, i32) {
    %c0_i32 = arith.constant 0 : i32
    %c0_i32_0 = arith.constant 0 : i32
    return %arg0, %c0_i32 : i32, i32
  }
  func.func @transform_3(%arg0: i32) -> (i32, i32) {
    %c0_i32 = arith.constant 0 : i32
    %c0_i32_0 = arith.constant 0 : i32
    %c0_i32_1 = arith.constant 0 : i32
    return %c0_i32, %c0_i32_0 : i32, i32
  }
  func.func @transform_4(%arg0: i32) -> (i32, i32) {
    %c0_i32 = arith.constant 0 : i32
    %c0_i32_0 = arith.constant 0 : i32
    %c0_i32_1 = arith.constant 0 : i32
    return %c0_i32, %c0_i32_0 : i32, i32
  }
  func.func @transform_5(%arg0: i32) -> (i32, i32, i32) {
    %c0_i32 = arith.constant 0 : i32
    %c0_i32_0 = arith.constant 0 : i32
    %c0_i32_1 = arith.constant 0 : i32
    return %arg0, %c0_i32, %c0_i32_0 : i32, i32, i32
  }
}

</mosaic_0001>

<llo_original>
// kernel: tpu_custom_call.1
$region0: #{tpu_custom_call.1}
  #allocation0 [shape = 'u32[]', space=smem, size = 0x4, offset = 0x4, fixed_abs, tag = 'smem constant byte address 0x4 - core index']
  #allocation1 [shape = 'u32[72,128]{1,0:T(1,128)}', space=vmem, size = 0x9000, scoped, tag = 'internal scratch']
  %s0 = inlined_call_operand.vmem [shape: f32[32,16], index: 0, kind: input, shape index: {}]
  %s1 = inlined_call_operand.vmem [shape: f32[32,32], index: 1, kind: input, shape index: {}]
  %s2 = inlined_call_operand.vmem [shape: s32[32,1], index: 2, kind: input, shape index: {}]
  %s3 = inlined_call_operand.vmem [shape: bf16[32,16], index: 3, kind: input, shape index: {}]
  %s4 = inlined_call_operand.vmem [shape: f32[1,16], index: 4, kind: input, shape index: {}]
  %s5 = inlined_call_operand.hbm [shape: f32[1,8,128], index: 5, kind: output, shape index: {}]
  %s6 = sld [smem:[#allocation0]]
  $region30: #{tpu_custom_call.1} parent=0
    _
  %s8 = ssub.s32 1, %s6
  %s9 = scalar_select 0, %s8, %s6
  $region1: #{tpu_custom_call.1} parent=0
    #allocation2 [shape = 'u8[4096]{0}', space=vmem, size = 0x1000, scoped, tag = 'output window, operand 0, single buffered']
    #allocation3 [shape = 's32[1]{0}', space=sflag, size = 0x4, scoped, tag = 'scoped memory for tpu_custom_call.1']
    %10 = vsyncpa [#allocation3], 0
    // Predicated region
    $region2: #{tpu_custom_call.1} parent=1 // pred_check
      _
    $region3: #{tpu_custom_call.1} parent=1 // pred_check_branch
      %12 = sbr.rel (0) target = $region5
    $region4: #{tpu_custom_call.1} parent=1 // pred_region
      _
    $region5: #{tpu_custom_call.1} parent=1 // pred_fallthru
      _
    // Predicated region
    $region6: #{tpu_custom_call.1} parent=1 // pred_check
      _
    $region7: #{tpu_custom_call.1} parent=1 // pred_check_branch
      %14 = sbr.rel (0) target = $region9
    $region8: #{tpu_custom_call.1} parent=1 // pred_region
      _
    $region9: #{tpu_custom_call.1} parent=1 // pred_fallthru
      _
    // Predicated region
    $region10: #{tpu_custom_call.1} parent=1 // pred_check
      _
    $region11: #{tpu_custom_call.1} parent=1 // pred_check_branch
      %16 = sbr.rel (0) target = $region13
    $region12: #{tpu_custom_call.1} parent=1 // pred_region
      _
    $region13: #{tpu_custom_call.1} parent=1 // pred_fallthru
      _
    // Predicated region
    $region14: #{tpu_custom_call.1} parent=1 // pred_check
      _
    $region15: #{tpu_custom_call.1} parent=1 // pred_check_branch
      %18 = sbr.rel (0) target = $region17
    $region16: #{tpu_custom_call.1} parent=1 // pred_region
      _
    $region17: #{tpu_custom_call.1} parent=1 // pred_fallthru
      _
    // Predicated region
    $region18: #{tpu_custom_call.1} parent=1 // pred_check
      _
    $region19: #{tpu_custom_call.1} parent=1 // pred_check_branch
      %20 = sbr.rel (0) target = $region21
    $region20: #{tpu_custom_call.1} parent=1 // pred_region
      _
    $region21: #{tpu_custom_call.1} parent=1 // pred_fallthru
      _
    %v22 = vld [vmem:[%s1] sm:$0xff]
    %v23 = vld [vmem:[%s1 + $0x8] sm:$0xff]
    %v24 = vld [vmem:[%s1 + $0x10] sm:$0xff]
    %v25 = vld [vmem:[%s1 + $0x18] sm:$0xff]
    %v26 = vpack.c.bf16 %v23, %v22
    %v27 = vpack.c.bf16 %v25, %v24
    %v28 = vld [vmem:[%s3] sm:$0xf]
    %v29 = vld [vmem:[%s3 + $0x4] sm:$0xf]
    %v30 = vld [vmem:[%s3 + $0x8] sm:$0xf]
    %v31 = vld [vmem:[%s3 + $0xc] sm:$0xf]
    %v32 = vld [vmem:[%s4] sm:$0x1]
    %v34 = vperm.slane %v32, 0
    %v40 = vunpack.c.l.b16 %v28
    %v41 = vunpack.c.l.b16 %v29
    %v42 = vunpack.c.l.b16 %v30
    %v43 = vunpack.c.l.b16 %v31
    %v44 = vpack.c.b16 %v41, %v40
    %v45 = vpack.c.b16 %v43, %v42
    %vm48 = vcmask 261120
    %v50 = vsel %vm48, %v26, 0
    %v53 = vsel %vm48, %v27, 0
    %55 = vmatpush.bf16.msra.mxu0 0
    %56 = vmatpush.bf16.msra.mxu0 0
    %57 = vmatpush.bf16.msra.mxu0 0
    %58 = vmatpush.bf16.msra.mxu0 0
    %59 = vmatpush.bf16.msra.mxu0 0
    %60 = vmatpush.bf16.msra.mxu0 0
    %61 = vmatpush.bf16.msra.mxu0 %v45
    %62 = vmatpush.bf16.msra.mxu0 %v44
    %63 = vmatmul.bf16.gmra.mxu0 %v50
    %v64 = vpop.f32.mrf.mxu0
    %v65 = vadd.f32 %v34, %v64
    %v66 = vpop.f32.mrf.mxu0
    %v67 = vadd.f32 %v34, %v66
    %68 = vmatmul.bf16.gmra.mxu0 %v53
    %v69 = vpop.f32.mrf.mxu0
    %v70 = vadd.f32 %v34, %v69
    %v71 = vpop.f32.mrf.mxu0
    %v72 = vadd.f32 %v34, %v71
    %73 = vdwg.mxu0
    %v74 = vmul.f32 %v65, 0.33333334
    %v75 = vmul.f32 %v67, 0.33333334
    %v76 = vmul.f32 %v70, 0.33333334
    %v77 = vmul.f32 %v72, 0.33333334
    %vm78 = vcmask 130048
    %v79 = vsel %vm78, %v74, -inf
    %80 = vmax.xlane.f32.xlu0 %v79
    %v81 = vpop.xlane.xlu0 %80
    %v82 = vsel %vm78, %v75, -inf
    %83 = vmax.xlane.f32.xlu0 %v82
    %v84 = vpop.xlane.xlu0 %83
    %v85 = vsel %vm78, %v76, -inf
    %86 = vmax.xlane.f32.xlu0 %v85
    %v87 = vpop.xlane.xlu0 %86
    %v88 = vsel %vm78, %v77, -inf
    %89 = vmax.xlane.f32.xlu0 %v88
    %v90 = vpop.xlane.xlu0 %89
    %v91 = vsub.f32 %v74, %v81
    %v92 = vsub.f32 %v75, %v84
    %v93 = vsub.f32 %v76, %v87
    %v94 = vsub.f32 %v77, %v90
    %v95 = vmul.f32 %v91, 1.442695
    %v96 = vpow.pop %v95
    %v97 = vmul.f32 %v92, 1.442695
    %v98 = vpow.pop %v97
    %v99 = vmul.f32 %v93, 1.442695
    %v100 = vpow.pop %v99
    %v101 = vmul.f32 %v94, 1.442695
    %v102 = vpow.pop %v101
    %v103 = vsel %vm78, %v96, 0.0
    %104 = vadd.xlane.f32.xlu0 %v103
    %v105 = vpop.xlane.xlu0 %104
    %v106 = vsel %vm78, %v98, 0.0
    %107 = vadd.xlane.f32.xlu0 %v106
    %v108 = vpop.xlane.xlu0 %107
    %v109 = vsel %vm78, %v100, 0.0
    %110 = vadd.xlane.f32.xlu0 %v109
    %v111 = vpop.xlane.xlu0 %110
    %v112 = vsel %vm78, %v102, 0.0
    %113 = vadd.xlane.f32.xlu0 %v112
    %v114 = vpop.xlane.xlu0 %113
    %v115 = vld [vmem:[%s0] sm:$0xff]
    %v116 = vld [vmem:[%s0 + $0x8] sm:$0xff]
    %v117 = vld [vmem:[%s0 + $0x10] sm:$0xff]
    %v118 = vld [vmem:[%s0 + $0x18] sm:$0xff]
    %v119 = vsel %vm78, %v115, -inf
    %120 = vmax.xlane.f32.xlu0 %v119
    %v121 = vpop.xlane.xlu0 %120
    %v122 = vsel %vm78, %v116, -inf
    %123 = vmax.xlane.f32.xlu0 %v122
    %v124 = vpop.xlane.xlu0 %123
    %v125 = vsel %vm78, %v117, -inf
    %126 = vmax.xlane.f32.xlu0 %v125
    %v127 = vpop.xlane.xlu0 %126
    %v128 = vsel %vm78, %v118, -inf
    %129 = vmax.xlane.f32.xlu0 %v128
    %v130 = vpop.xlane.xlu0 %129
    %v131 = vsub.f32 %v115, %v121
    %v132 = vsub.f32 %v116, %v124
    %v133 = vsub.f32 %v117, %v127
    %v134 = vsub.f32 %v118, %v130
    %v135 = vmul.f32 %v131, 0.33333334
    %v136 = vmul.f32 %v132, 0.33333334
    %v137 = vmul.f32 %v133, 0.33333334
    %v138 = vmul.f32 %v134, 0.33333334
    %v139 = vmul.f32 %v135, 1.442695
    %v140 = vpow.pop %v139
    %v141 = vmul.f32 %v136, 1.442695
    %v142 = vpow.pop %v141
    %v143 = vmul.f32 %v137, 1.442695
    %v144 = vpow.pop %v143
    %v145 = vmul.f32 %v138, 1.442695
    %v146 = vpow.pop %v145
    %v147 = vsel %vm78, %v140, 0.0
    %148 = vadd.xlane.f32.xlu0 %v147
    %v149 = vpop.xlane.xlu0 %148
    %v150 = vsel %vm78, %v142, 0.0
    %151 = vadd.xlane.f32.xlu0 %v150
    %v152 = vpop.xlane.xlu0 %151
    %v153 = vsel %vm78, %v144, 0.0
    %154 = vadd.xlane.f32.xlu0 %v153
    %v155 = vpop.xlane.xlu0 %154
    %v156 = vsel %vm78, %v146, 0.0
    %157 = vadd.xlane.f32.xlu0 %v156
    %v158 = vpop.xlane.xlu0 %157
    %v159 = vlog2.pop %v149
    %v160 = vmul.f32 %v159, 0.6931472
    %v161 = vlog2.pop %v152
    %v162 = vmul.f32 %v161, 0.6931472
    %v163 = vlog2.pop %v155
    %v164 = vmul.f32 %v163, 0.6931472
    %v165 = vlog2.pop %v158
    %v166 = vmul.f32 %v165, 0.6931472
    %v167 = vmul.f32 %v131, 1.442695
    %v168 = vpow.pop %v167
    %v169 = vmul.f32 %v132, 1.442695
    %v170 = vpow.pop %v169
    %v171 = vmul.f32 %v133, 1.442695
    %v172 = vpow.pop %v171
    %v173 = vmul.f32 %v134, 1.442695
    %v174 = vpow.pop %v173
    %v175 = vsel %vm78, %v168, 0.0
    %176 = vadd.xlane.f32.xlu0 %v175
    %v177 = vpop.xlane.xlu0 %176
    %v178 = vsel %vm78, %v170, 0.0
    %179 = vadd.xlane.f32.xlu0 %v178
    %v180 = vpop.xlane.xlu0 %179
    %v181 = vsel %vm78, %v172, 0.0
    %182 = vadd.xlane.f32.xlu0 %v181
    %v183 = vpop.xlane.xlu0 %182
    %v184 = vsel %vm78, %v174, 0.0
    %185 = vadd.xlane.f32.xlu0 %v184
    %v186 = vpop.xlane.xlu0 %185
    %v187 = vlog2.pop %v177
    %v188 = vmul.f32 %v187, 0.6931472
    %v189 = vlog2.pop %v180
    %v190 = vmul.f32 %v189, 0.6931472
    %v191 = vlog2.pop %v183
    %v192 = vmul.f32 %v191, 0.6931472
    %v193 = vlog2.pop %v186
    %v194 = vmul.f32 %v193, 0.6931472
    %v195 = vsub.f32 %v91, %v135
    %v196 = vsub.f32 %v92, %v136
    %v197 = vsub.f32 %v93, %v137
    %v198 = vsub.f32 %v94, %v138
    %v199 = vmul.f32 %v96, %v195
    %v200 = vmul.f32 %v98, %v196
    %v201 = vmul.f32 %v100, %v197
    %v202 = vmul.f32 %v102, %v198
    %v203 = vsel %vm78, %v199, 0.0
    %204 = vadd.xlane.f32.xlu0 %v203
    %v205 = vpop.xlane.xlu0 %204
    %v206 = vsel %vm78, %v200, 0.0
    %207 = vadd.xlane.f32.xlu0 %v206
    %v208 = vpop.xlane.xlu0 %207
    %v209 = vsel %vm78, %v201, 0.0
    %210 = vadd.xlane.f32.xlu0 %v209
    %v211 = vpop.xlane.xlu0 %210
    %v212 = vsel %vm78, %v202, 0.0
    %213 = vadd.xlane.f32.xlu0 %v212
    %v214 = vpop.xlane.xlu0 %213
    %v215 = vrcp.pop %v105
    %v216 = vmul.f32 %v105, %v215
    %v217 = vsub.f32 1.0, %v216
    %v218 = vmul.f32 %v215, %v217
    %v219 = vadd.f32 %v215, %v218
    %vm220 = vweird.f32 %v105
    %vm221 = vweird.f32 %v215
    %vm222 = vmor %vm220, %vm221
    %v223 = vsel %vm222, %v215, %v219
    %v224 = vand.u32 2147483647, %v105
    %vm225 = vcmp.eq.f32.partialorder %v224, 8.507059e+37
    %v226 = vand.u32 %v105, 2147483648
    %v227 = vor.u32 1.1754944e-38, %v226
    %v228 = vsel %vm225, %v227, %v223
    %v229 = vmul.f32 %v205, %v228
    %v230 = vrcp.pop %v108
    %v231 = vmul.f32 %v108, %v230
    %v232 = vsub.f32 1.0, %v231
    %v233 = vmul.f32 %v230, %v232
    %v234 = vadd.f32 %v230, %v233
    %vm235 = vweird.f32 %v108
    %vm236 = vweird.f32 %v230
    %vm237 = vmor %vm235, %vm236
    %v238 = vsel %vm237, %v230, %v234
    %v239 = vand.u32 2147483647, %v108
    %vm240 = vcmp.eq.f32.partialorder %v239, 8.507059e+37
    %v241 = vand.u32 %v108, 2147483648
    %v242 = vor.u32 1.1754944e-38, %v241
    %v243 = vsel %vm240, %v242, %v238
    %v244 = vmul.f32 %v208, %v243
    %v245 = vrcp.pop %v111
    %v246 = vmul.f32 %v111, %v245
    %v247 = vsub.f32 1.0, %v246
    %v248 = vmul.f32 %v245, %v247
    %v249 = vadd.f32 %v245, %v248
    %vm250 = vweird.f32 %v111
    %vm251 = vweird.f32 %v245
    %vm252 = vmor %vm250, %vm251
    %v253 = vsel %vm252, %v245, %v249
    %v254 = vand.u32 2147483647, %v111
    %vm255 = vcmp.eq.f32.partialorder %v254, 8.507059e+37
    %v256 = vand.u32 %v111, 2147483648
    %v257 = vor.u32 1.1754944e-38, %v256
    %v258 = vsel %vm255, %v257, %v253
    %v259 = vmul.f32 %v211, %v258
    %v260 = vrcp.pop %v114
    %v261 = vmul.f32 %v114, %v260
    %v262 = vsub.f32 1.0, %v261
    %v263 = vmul.f32 %v260, %v262
    %v264 = vadd.f32 %v260, %v263
    %vm265 = vweird.f32 %v114
    %vm266 = vweird.f32 %v260
    %vm267 = vmor %vm265, %vm266
    %v268 = vsel %vm267, %v260, %v264
    %v269 = vand.u32 2147483647, %v114
    %vm270 = vcmp.eq.f32.partialorder %v269, 8.507059e+37
    %v271 = vand.u32 %v114, 2147483648
    %v272 = vor.u32 1.1754944e-38, %v271
    %v273 = vsel %vm270, %v272, %v268
    %v274 = vmul.f32 %v214, %v273
    %v275 = vlog2.pop %v105
    %v276 = vmul.f32 %v275, 0.6931472
    %v277 = vlog2.pop %v108
    %v278 = vmul.f32 %v277, 0.6931472
    %v279 = vlog2.pop %v111
    %v280 = vmul.f32 %v279, 0.6931472
    %v281 = vlog2.pop %v114
    %v282 = vmul.f32 %v281, 0.6931472
    %v283 = vsub.f32 %v229, %v276
    %v284 = vsub.f32 %v244, %v278
    %v285 = vsub.f32 %v259, %v280
    %v286 = vsub.f32 %v274, %v282
    %v287 = vadd.f32 %v283, %v160
    %v288 = vadd.f32 %v284, %v162
    %v289 = vadd.f32 %v285, %v164
    %v290 = vadd.f32 %v286, %v166
    %v291 = vld [vmem:[%s2] sm:$0xff]
    %v292 = vld [vmem:[%s2 + $0x8] sm:$0xff]
    %v293 = vld [vmem:[%s2 + $0x10] sm:$0xff]
    %v294 = vld [vmem:[%s2 + $0x18] sm:$0xff]
    %v295 = vlaneseq
    %v296 = vand.u32 %v295, 127
    %297 = vset.pattern.permute.xlu0 0
    %298 = vperm.xlu0 %297, %v291
    %v299 = vpop.permute.xlu0 %298
    %300 = vset.pattern.permute.xlu0 0
    %301 = vperm.xlu0 %300, %v292
    %v302 = vpop.permute.xlu0 %301
    %303 = vset.pattern.permute.xlu0 0
    %304 = vperm.xlu0 %303, %v293
    %v305 = vpop.permute.xlu0 %304
    %306 = vset.pattern.permute.xlu0 0
    %307 = vperm.xlu0 %306, %v294
    %v308 = vpop.permute.xlu0 %307
    %vm309 = vcmp.eq.s32.totalorder %v296, %v299
    %vm310 = vcmp.eq.s32.totalorder %v296, %v302
    %vm311 = vcmp.eq.s32.totalorder %v296, %v305
    %vm312 = vcmp.eq.s32.totalorder %v296, %v308
    %v313 = vsel %vm309, %v115, 0.0
    %v314 = vsel %vm310, %v116, 0.0
    %v315 = vsel %vm311, %v117, 0.0
    %v316 = vsel %vm312, %v118, 0.0
    %v317 = vsel %vm78, %v313, 0.0
    %318 = vadd.xlane.f32.xlu0 %v317
    %v319 = vpop.xlane.xlu0 %318
    %v320 = vsel %vm78, %v314, 0.0
    %321 = vadd.xlane.f32.xlu0 %v320
    %v322 = vpop.xlane.xlu0 %321
    %v323 = vsel %vm78, %v315, 0.0
    %324 = vadd.xlane.f32.xlu0 %v323
    %v325 = vpop.xlane.xlu0 %324
    %v326 = vsel %vm78, %v316, 0.0
    %327 = vadd.xlane.f32.xlu0 %v326
    %v328 = vpop.xlane.xlu0 %327
    %v329 = vadd.f32 %v121, %v188
    %v330 = vadd.f32 %v124, %v190
    %v331 = vadd.f32 %v127, %v192
    %v332 = vadd.f32 %v130, %v194
    %v333 = vsub.f32 %v329, %v319
    %v334 = vsub.f32 %v330, %v322
    %v335 = vsub.f32 %v331, %v325
    %v336 = vsub.f32 %v332, %v328
    %v337 = vmul.f32 %v287, 0.196875
    %v338 = vmul.f32 %v288, 0.196875
    %v339 = vmul.f32 %v289, 0.196875
    %v340 = vmul.f32 %v290, 0.196875
    %v341 = vmul.f32 %v333, 0.009375
    %v342 = vmul.f32 %v334, 0.009375
    %v343 = vmul.f32 %v335, 0.009375
    %v344 = vmul.f32 %v336, 0.009375
    %v345 = vadd.f32 %v337, %v341
    %v346 = vadd.f32 %v338, %v342
    %v347 = vadd.f32 %v339, %v343
    %v348 = vadd.f32 %v340, %v344
    %vm349 = vcmask 7168
    %v350 = vsel %vm349, %v345, 0.0
    %v351 = vsel %vm349, %v346, 0.0
    %v352 = vadd.f32 %v350, %v351
    %v353 = vsel %vm349, %v347, 0.0
    %v354 = vadd.f32 %v352, %v353
    %v355 = vsel %vm349, %v348, 0.0
    %v356 = vadd.f32 %v354, %v355
    %357 = vadd.xlane.f32.xlu0 %v356
    %v358 = vpop.xlane.xlu0 %357
    %v359 = vrot.slane %v358, 4
    %v360 = vadd.f32 %v358, %v359
    %v361 = vrot.slane %v360, 2
    %v362 = vadd.f32 %v360, %v361
    %v363 = vrot.slane %v362, 1
    %v364 = vadd.f32 %v362, %v363
    %s365 = vtos %v364
    %v366 = vstv %s365
    %v367 = vadd.f32 %v366, 0.0
    %368 = vst [vmem:[#allocation2] sm:$0xff] %v367
    // Predicated region
    $region22: #{tpu_custom_call.1} parent=1 // pred_check
      _
    $region23: #{tpu_custom_call.1} parent=1 // pred_check_branch
      %370 = sbr.rel (0) target = $region25
    $region24: #{tpu_custom_call.1} parent=1 // pred_region
      %372 = vsyncadd [#allocation3], 0
      %s374 = sshll.u32 [#allocation2], 4
      %s375 = int_to_ptr.vmem [resolvable:$true] %s374
      %s376 = sshll.u32 %s5, 4
      %s377 = int_to_ptr.hbm [resolvable:$true] %s376
      %379 = dma.vmem_to_hbm [thread:$0]  %s375, 128, %s377, [#allocation3]
    $region25: #{tpu_custom_call.1} parent=1 // pred_fallthru
      _
    // Predicated region
    $region26: #{tpu_custom_call.1} parent=1 // pred_check
      _
    $region27: #{tpu_custom_call.1} parent=1 // pred_check_branch
      %381 = sbr.rel (0) target = $region29
    $region28: #{tpu_custom_call.1} parent=1 // pred_region
      %383 = dma.done [#allocation3], 128
    $region29: #{tpu_custom_call.1} parent=1 // pred_fallthru
      _
    %384 = vsyncpa [#allocation3], 1

// kernel: tpu_custom_call.1
$region0: #{tpu_custom_call.1}
  #allocation0 [shape = 'u32[]', space=smem, size = 0x4, offset = 0x4, fixed_abs, tag = 'smem constant byte address 0x4 - core index']
  #allocation1 [shape = 'u32[72,128]{1,0:T(1,128)}', space=vmem, size = 0x9000, scoped, tag = 'internal scratch']
  %s0 = inlined_call_operand.vmem [shape: f32[32,16], index: 0, kind: input, shape index: {}]
  %s1 = inlined_call_operand.vmem [shape: f32[32,32], index: 1, kind: input, shape index: {}]
  %s2 = inlined_call_operand.vmem [shape: s32[32,1], index: 2, kind: input, shape index: {}]
  %s3 = inlined_call_operand.vmem [shape: bf16[32,16], index: 3, kind: input, shape index: {}]
  %s4 = inlined_call_operand.vmem [shape: f32[1,16], index: 4, kind: input, shape index: {}]
  %s5 = inlined_call_operand.hbm [shape: f32[1,8,128], index: 5, kind: output, shape index: {}]
  %s6 = sld [smem:[#allocation0]]
  $region30: #{tpu_custom_call.1} parent=0
    _
  %s8 = ssub.s32 1, %s6
  %s9 = scalar_select 0, %s8, %s6
  $region1: #{tpu_custom_call.1} parent=0
    #allocation2 [shape = 'u8[4096]{0}', space=vmem, size = 0x1000, scoped, tag = 'output window, operand 0, single buffered']
    #allocation3 [shape = 's32[1]{0}', space=sflag, size = 0x4, scoped, tag = 'scoped memory for tpu_custom_call.1']
    %10 = vsyncpa [#allocation3], 0
    // Predicated region
    $region2: #{tpu_custom_call.1} parent=1 // pred_check
      _
    $region3: #{tpu_custom_call.1} parent=1 // pred_check_branch
      %12 = sbr.rel (0) target = $region5
    $region4: #{tpu_custom_call.1} parent=1 // pred_region
      _
    $region5: #{tpu_custom_call.1} parent=1 // pred_fallthru
      _
    // Predicated region
    $region6: #{tpu_custom_call.1} parent=1 // pred_check
      _
    $region7: #{tpu_custom_call.1} parent=1 // pred_check_branch
      %14 = sbr.rel (0) target = $region9
    $region8: #{tpu_custom_call.1} parent=1 // pred_region
      _
    $region9: #{tpu_custom_call.1} parent=1 // pred_fallthru
      _
    // Predicated region
    $region10: #{tpu_custom_call.1} parent=1 // pred_check
      _
    $region11: #{tpu_custom_call.1} parent=1 // pred_check_branch
      %16 = sbr.rel (0) target = $region13
    $region12: #{tpu_custom_call.1} parent=1 // pred_region
      _
    $region13: #{tpu_custom_call.1} parent=1 // pred_fallthru
      _
    // Predicated region
    $region14: #{tpu_custom_call.1} parent=1 // pred_check
      _
    $region15: #{tpu_custom_call.1} parent=1 // pred_check_branch
      %18 = sbr.rel (0) target = $region17
    $region16: #{tpu_custom_call.1} parent=1 // pred_region
      _
    $region17: #{tpu_custom_call.1} parent=1 // pred_fallthru
      _
    // Predicated region
    $region18: #{tpu_custom_call.1} parent=1 // pred_check
      _
    $region19: #{tpu_custom_call.1} parent=1 // pred_check_branch
      %20 = sbr.rel (0) target = $region21
    $region20: #{tpu_custom_call.1} parent=1 // pred_region
      _
    $region21: #{tpu_custom_call.1} parent=1 // pred_fallthru
      _
    %v22 = vld [vmem:[%s1] sm:$0xff]
    %v23 = vld [vmem:[%s1 + $0x8] sm:$0xff]
    %v24 = vld [vmem:[%s1 + $0x10] sm:$0xff]
    %v25 = vld [vmem:[%s1 + $0x18] sm:$0xff]
    %v26 = vpack.c.bf16 %v23, %v22
    %v27 = vpack.c.bf16 %v25, %v24
    %v28 = vld [vmem:[%s3] sm:$0xf]
    %v29 = vld [vmem:[%s3 + $0x4] sm:$0xf]
    %v30 = vld [vmem:[%s3 + $0x8] sm:$0xf]
    %v31 = vld [vmem:[%s3 + $0xc] sm:$0xf]
    %v32 = vld [vmem:[%s4] sm:$0x1]
    %v34 = vperm.slane %v32, 0
    %v40 = vunpack.c.l.b16 %v28
    %v41 = vunpack.c.l.b16 %v29
    %v42 = vunpack.c.l.b16 %v30
    %v43 = vunpack.c.l.b16 %v31
    %v44 = vpack.c.b16 %v41, %v40
    %v45 = vpack.c.b16 %v43, %v42
    %vm48 = vcmask 261120
    %v50 = vsel %vm48, %v26, 0
    %v53 = vsel %vm48, %v27, 0
    %55 = vmatpush.bf16.msra.mxu0 0
    %56 = vmatpush.bf16.msra.mxu0 0
    %57 = vmatpush.bf16.msra.mxu0 0
    %58 = vmatpush.bf16.msra.mxu0 0
    %59 = vmatpush.bf16.msra.mxu0 0
    %60 = vmatpush.bf16.msra.mxu0 0
    %61 = vmatpush.bf16.msra.mxu0 %v45
    %62 = vmatpush.bf16.msra.mxu0 %v44
    %63 = vmatmul.bf16.gmra.mxu0 %v50
    %v64 = vpop.f32.mrf.mxu0
    %v65 = vadd.f32 %v34, %v64
    %v66 = vpop.f32.mrf.mxu0
    %v67 = vadd.f32 %v34, %v66
    %68 = vmatmul.bf16.gmra.mxu0 %v53
    %v69 = vpop.f32.mrf.mxu0
    %v70 = vadd.f32 %v34, %v69
    %v71 = vpop.f32.mrf.mxu0
    %v72 = vadd.f32 %v34, %v71
    %73 = vdwg.mxu0
    %v74 = vmul.f32 %v65, 0.33333334
    %v75 = vmul.f32 %v67, 0.33333334
    %v76 = vmul.f32 %v70, 0.33333334
    %v77 = vmul.f32 %v72, 0.33333334
    %vm78 = vcmask 130048
    %v79 = vsel %vm78, %v74, -inf
    %80 = vmax.xlane.f32.xlu0 %v79
    %v81 = vpop.xlane.xlu0 %80
    %v82 = vsel %vm78, %v75, -inf
    %83 = vmax.xlane.f32.xlu0 %v82
    %v84 = vpop.xlane.xlu0 %83
    %v85 = vsel %vm78, %v76, -inf
    %86 = vmax.xlane.f32.xlu0 %v85
    %v87 = vpop.xlane.xlu0 %86
    %v88 = vsel %vm78, %v77, -inf
    %89 = vmax.xlane.f32.xlu0 %v88
    %v90 = vpop.xlane.xlu0 %89
    %v91 = vsub.f32 %v74, %v81
    %v92 = vsub.f32 %v75, %v84
    %v93 = vsub.f32 %v76, %v87
    %v94 = vsub.f32 %v77, %v90
    %v95 = vmul.f32 %v91, 1.442695
    %v96 = vpow.pop %v95
    %v97 = vmul.f32 %v92, 1.442695
    %v98 = vpow.pop %v97
    %v99 = vmul.f32 %v93, 1.442695
    %v100 = vpow.pop %v99
    %v101 = vmul.f32 %v94, 1.442695
    %v102 = vpow.pop %v101
    %v103 = vsel %vm78, %v96, 0.0
    %104 = vadd.xlane.f32.xlu0 %v103
    %v105 = vpop.xlane.xlu0 %104
    %v106 = vsel %vm78, %v98, 0.0
    %107 = vadd.xlane.f32.xlu0 %v106
    %v108 = vpop.xlane.xlu0 %107
    %v109 = vsel %vm78, %v100, 0.0
    %110 = vadd.xlane.f32.xlu0 %v109
    %v111 = vpop.xlane.xlu0 %110
    %v112 = vsel %vm78, %v102, 0.0
    %113 = vadd.xlane.f32.xlu0 %v112
    %v114 = vpop.xlane.xlu0 %113
    %v115 = vld [vmem:[%s0] sm:$0xff]
    %v116 = vld [vmem:[%s0 + $0x8] sm:$0xff]
    %v117 = vld [vmem:[%s0 + $0x10] sm:$0xff]
    %v118 = vld [vmem:[%s0 + $0x18] sm:$0xff]
    %v119 = vsel %vm78, %v115, -inf
    %120 = vmax.xlane.f32.xlu0 %v119
    %v121 = vpop.xlane.xlu0 %120
    %v122 = vsel %vm78, %v116, -inf
    %123 = vmax.xlane.f32.xlu0 %v122
    %v124 = vpop.xlane.xlu0 %123
    %v125 = vsel %vm78, %v117, -inf
    %126 = vmax.xlane.f32.xlu0 %v125
    %v127 = vpop.xlane.xlu0 %126
    %v128 = vsel %vm78, %v118, -inf
    %129 = vmax.xlane.f32.xlu0 %v128
    %v130 = vpop.xlane.xlu0 %129
    %v131 = vsub.f32 %v115, %v121
    %v132 = vsub.f32 %v116, %v124
    %v133 = vsub.f32 %v117, %v127
    %v134 = vsub.f32 %v118, %v130
    %v135 = vmul.f32 %v131, 0.33333334
    %v136 = vmul.f32 %v132, 0.33333334
    %v137 = vmul.f32 %v133, 0.33333334
    %v138 = vmul.f32 %v134, 0.33333334
    %v139 = vmul.f32 %v135, 1.442695
    %v140 = vpow.pop %v139
    %v141 = vmul.f32 %v136, 1.442695
    %v142 = vpow.pop %v141
    %v143 = vmul.f32 %v137, 1.442695
    %v144 = vpow.pop %v143
    %v145 = vmul.f32 %v138, 1.442695
    %v146 = vpow.pop %v145
    %v147 = vsel %vm78, %v140, 0.0
    %148 = vadd.xlane.f32.xlu0 %v147
    %v149 = vpop.xlane.xlu0 %148
    %v150 = vsel %vm78, %v142, 0.0
    %151 = vadd.xlane.f32.xlu0 %v150
    %v152 = vpop.xlane.xlu0 %151
    %v153 = vsel %vm78, %v144, 0.0
    %154 = vadd.xlane.f32.xlu0 %v153
    %v155 = vpop.xlane.xlu0 %154
    %v156 = vsel %vm78, %v146, 0.0
    %157 = vadd.xlane.f32.xlu0 %v156
    %v158 = vpop.xlane.xlu0 %157
    %v159 = vlog2.pop %v149
    %v160 = vmul.f32 %v159, 0.6931472
    %v161 = vlog2.pop %v152
    %v162 = vmul.f32 %v161, 0.6931472
    %v163 = vlog2.pop %v155
    %v164 = vmul.f32 %v163, 0.6931472
    %v165 = vlog2.pop %v158
    %v166 = vmul.f32 %v165, 0.6931472
    %v167 = vmul.f32 %v131, 1.442695
    %v168 = vpow.pop %v167
    %v169 = vmul.f32 %v132, 1.442695
    %v170 = vpow.pop %v169
    %v171 = vmul.f32 %v133, 1.442695
    %v172 = vpow.pop %v171
    %v173 = vmul.f32 %v134, 1.442695
    %v174 = vpow.pop %v173
    %v175 = vsel %vm78, %v168, 0.0
    %176 = vadd.xlane.f32.xlu0 %v175
    %v177 = vpop.xlane.xlu0 %176
    %v178 = vsel %vm78, %v170, 0.0
    %179 = vadd.xlane.f32.xlu0 %v178
    %v180 = vpop.xlane.xlu0 %179
    %v181 = vsel %vm78, %v172, 0.0
    %182 = vadd.xlane.f32.xlu0 %v181
    %v183 = vpop.xlane.xlu0 %182
    %v184 = vsel %vm78, %v174, 0.0
    %185 = vadd.xlane.f32.xlu0 %v184
    %v186 = vpop.xlane.xlu0 %185
    %v187 = vlog2.pop %v177
    %v188 = vmul.f32 %v187, 0.6931472
    %v189 = vlog2.pop %v180
    %v190 = vmul.f32 %v189, 0.6931472
    %v191 = vlog2.pop %v183
    %v192 = vmul.f32 %v191, 0.6931472
    %v193 = vlog2.pop %v186
    %v194 = vmul.f32 %v193, 0.6931472
    %v195 = vsub.f32 %v91, %v135
    %v196 = vsub.f32 %v92, %v136
    %v197 = vsub.f32 %v93, %v137
    %v198 = vsub.f32 %v94, %v138
    %v199 = vmul.f32 %v96, %v195
    %v200 = vmul.f32 %v98, %v196
    %v201 = vmul.f32 %v100, %v197
    %v202 = vmul.f32 %v102, %v198
    %v203 = vsel %vm78, %v199, 0.0
    %204 = vadd.xlane.f32.xlu0 %v203
    %v205 = vpop.xlane.xlu0 %204
    %v206 = vsel %vm78, %v200, 0.0
    %207 = vadd.xlane.f32.xlu0 %v206
    %v208 = vpop.xlane.xlu0 %207
    %v209 = vsel %vm78, %v201, 0.0
    %210 = vadd.xlane.f32.xlu0 %v209
    %v211 = vpop.xlane.xlu0 %210
    %v212 = vsel %vm78, %v202, 0.0
    %213 = vadd.xlane.f32.xlu0 %v212
    %v214 = vpop.xlane.xlu0 %213
    %v215 = vrcp.pop %v105
    %v216 = vmul.f32 %v105, %v215
    %v217 = vsub.f32 1.0, %v216
    %v218 = vmul.f32 %v215, %v217
    %v219 = vadd.f32 %v215, %v218
    %vm220 = vweird.f32 %v105
    %vm221 = vweird.f32 %v215
    %vm222 = vmor %vm220, %vm221
    %v223 = vsel %vm222, %v215, %v219
    %v224 = vand.u32 2147483647, %v105
    %vm225 = vcmp.eq.f32.partialorder %v224, 8.507059e+37
    %v226 = vand.u32 %v105, 2147483648
    %v227 = vor.u32 1.1754944e-38, %v226
    %v228 = vsel %vm225, %v227, %v223
    %v229 = vmul.f32 %v205, %v228
    %v230 = vrcp.pop %v108
    %v231 = vmul.f32 %v108, %v230
    %v232 = vsub.f32 1.0, %v231
    %v233 = vmul.f32 %v230, %v232
    %v234 = vadd.f32 %v230, %v233
    %vm235 = vweird.f32 %v108
    %vm236 = vweird.f32 %v230
    %vm237 = vmor %vm235, %vm236
    %v238 = vsel %vm237, %v230, %v234
    %v239 = vand.u32 2147483647, %v108
    %vm240 = vcmp.eq.f32.partialorder %v239, 8.507059e+37
    %v241 = vand.u32 %v108, 2147483648
    %v242 = vor.u32 1.1754944e-38, %v241
    %v243 = vsel %vm240, %v242, %v238
    %v244 = vmul.f32 %v208, %v243
    %v245 = vrcp.pop %v111
    %v246 = vmul.f32 %v111, %v245
    %v247 = vsub.f32 1.0, %v246
    %v248 = vmul.f32 %v245, %v247
    %v249 = vadd.f32 %v245, %v248
    %vm250 = vweird.f32 %v111
    %vm251 = vweird.f32 %v245
    %vm252 = vmor %vm250, %vm251
    %v253 = vsel %vm252, %v245, %v249
    %v254 = vand.u32 2147483647, %v111
    %vm255 = vcmp.eq.f32.partialorder %v254, 8.507059e+37
    %v256 = vand.u32 %v111, 2147483648
    %v257 = vor.u32 1.1754944e-38, %v256
    %v258 = vsel %vm255, %v257, %v253
    %v259 = vmul.f32 %v211, %v258
    %v260 = vrcp.pop %v114
    %v261 = vmul.f32 %v114, %v260
    %v262 = vsub.f32 1.0, %v261
    %v263 = vmul.f32 %v260, %v262
    %v264 = vadd.f32 %v260, %v263
    %vm265 = vweird.f32 %v114
    %vm266 = vweird.f32 %v260
    %vm267 = vmor %vm265, %vm266
    %v268 = vsel %vm267, %v260, %v264
    %v269 = vand.u32 2147483647, %v114
    %vm270 = vcmp.eq.f32.partialorder %v269, 8.507059e+37
    %v271 = vand.u32 %v114, 2147483648
    %v272 = vor.u32 1.1754944e-38, %v271
    %v273 = vsel %vm270, %v272, %v268
    %v274 = vmul.f32 %v214, %v273
    %v275 = vlog2.pop %v105
    %v276 = vmul.f32 %v275, 0.6931472
    %v277 = vlog2.pop %v108
    %v278 = vmul.f32 %v277, 0.6931472
    %v279 = vlog2.pop %v111
    %v280 = vmul.f32 %v279, 0.6931472
    %v281 = vlog2.pop %v114
    %v282 = vmul.f32 %v281, 0.6931472
    %v283 = vsub.f32 %v229, %v276
    %v284 = vsub.f32 %v244, %v278
    %v285 = vsub.f32 %v259, %v280
    %v286 = vsub.f32 %v274, %v282
    %v287 = vadd.f32 %v283, %v160
    %v288 = vadd.f32 %v284, %v162
    %v289 = vadd.f32 %v285, %v164
    %v290 = vadd.f32 %v286, %v166
    %v291 = vld [vmem:[%s2] sm:$0xff]
    %v292 = vld [vmem:[%s2 + $0x8] sm:$0xff]
    %v293 = vld [vmem:[%s2 + $0x10] sm:$0xff]
    %v294 = vld [vmem:[%s2 + $0x18] sm:$0xff]
    %v295 = vlaneseq
    %v296 = vand.u32 %v295, 127
    %297 = vset.pattern.permute.xlu0 0
    %298 = vperm.xlu0 %297, %v291
    %v299 = vpop.permute.xlu0 %298
    %300 = vset.pattern.permute.xlu0 0
    %301 = vperm.xlu0 %300, %v292
    %v302 = vpop.permute.xlu0 %301
    %303 = vset.pattern.permute.xlu0 0
    %304 = vperm.xlu0 %303, %v293
    %v305 = vpop.permute.xlu0 %304
    %306 = vset.pattern.permute.xlu0 0
    %307 = vperm.xlu0 %306, %v294
    %v308 = vpop.permute.xlu0 %307
    %vm309 = vcmp.eq.s32.totalorder %v296, %v299
    %vm310 = vcmp.eq.s32.totalorder %v296, %v302
    %vm311 = vcmp.eq.s32.totalorder %v296, %v305
    %vm312 = vcmp.eq.s32.totalorder %v296, %v308
    %v313 = vsel %vm309, %v115, 0.0
    %v314 = vsel %vm310, %v116, 0.0
    %v315 = vsel %vm311, %v117, 0.0
    %v316 = vsel %vm312, %v118, 0.0
    %v317 = vsel %vm78, %v313, 0.0
    %318 = vadd.xlane.f32.xlu0 %v317
    %v319 = vpop.xlane.xlu0 %318
    %v320 = vsel %vm78, %v314, 0.0
    %321 = vadd.xlane.f32.xlu0 %v320
    %v322 = vpop.xlane.xlu0 %321
    %v323 = vsel %vm78, %v315, 0.0
    %324 = vadd.xlane.f32.xlu0 %v323
    %v325 = vpop.xlane.xlu0 %324
    %v326 = vsel %vm78, %v316, 0.0
    %327 = vadd.xlane.f32.xlu0 %v326
    %v328 = vpop.xlane.xlu0 %327
    %v329 = vadd.f32 %v121, %v188
    %v330 = vadd.f32 %v124, %v190
    %v331 = vadd.f32 %v127, %v192
    %v332 = vadd.f32 %v130, %v194
    %v333 = vsub.f32 %v329, %v319
    %v334 = vsub.f32 %v330, %v322
    %v335 = vsub.f32 %v331, %v325
    %v336 = vsub.f32 %v332, %v328
    %v337 = vmul.f32 %v287, 0.196875
    %v338 = vmul.f32 %v288, 0.196875
    %v339 = vmul.f32 %v289, 0.196875
    %v340 = vmul.f32 %v290, 0.196875
    %v341 = vmul.f32 %v333, 0.009375
    %v342 = vmul.f32 %v334, 0.009375
    %v343 = vmul.f32 %v335, 0.009375
    %v344 = vmul.f32 %v336, 0.009375
    %v345 = vadd.f32 %v337, %v341
    %v346 = vadd.f32 %v338, %v342
    %v347 = vadd.f32 %v339, %v343
    %v348 = vadd.f32 %v340, %v344
    %vm349 = vcmask 7168
    %v350 = vsel %vm349, %v345, 0.0
    %v351 = vsel %vm349, %v346, 0.0
    %v352 = vadd.f32 %v350, %v351
    %v353 = vsel %vm349, %v347, 0.0
    %v354 = vadd.f32 %v352, %v353
    %v355 = vsel %vm349, %v348, 0.0
    %v356 = vadd.f32 %v354, %v355
    %357 = vadd.xlane.f32.xlu0 %v356
    %v358 = vpop.xlane.xlu0 %357
    %v359 = vrot.slane %v358, 4
    %v360 = vadd.f32 %v358, %v359
    %v361 = vrot.slane %v360, 2
    %v362 = vadd.f32 %v360, %v361
    %v363 = vrot.slane %v362, 1
    %v364 = vadd.f32 %v362, %v363
    %s365 = vtos %v364
    %v366 = vstv %s365
    %v367 = vadd.f32 %v366, 0.0
    %368 = vst [vmem:[#allocation2] sm:$0xff] %v367
    // Predicated region
    $region22: #{tpu_custom_call.1} parent=1 // pred_check
      _
    $region23: #{tpu_custom_call.1} parent=1 // pred_check_branch
      %370 = sbr.rel (0) target = $region25
    $region24: #{tpu_custom_call.1} parent=1 // pred_region
      %372 = vsyncadd [#allocation3], 0
      %s374 = sshll.u32 [#allocation2], 4
      %s375 = int_to_ptr.vmem [resolvable:$true] %s374
      %s376 = sshll.u32 %s5, 4
      %s377 = int_to_ptr.hbm [resolvable:$true] %s376
      %379 = dma.vmem_to_hbm [thread:$0]  %s375, 128, %s377, [#allocation3]
    $region25: #{tpu_custom_call.1} parent=1 // pred_fallthru
      _
    // Predicated region
    $region26: #{tpu_custom_call.1} parent=1 // pred_check
      _
    $region27: #{tpu_custom_call.1} parent=1 // pred_check_branch
      %381 = sbr.rel (0) target = $region29
    $region28: #{tpu_custom_call.1} parent=1 // pred_region
      %383 = dma.done [#allocation3], 128
    $region29: #{tpu_custom_call.1} parent=1 // pred_fallthru
      _
    %384 = vsyncpa [#allocation3], 1

</llo_original>
